<compile_context>
chip_gen: v7x
topology: tpu7x:2x2x1
jax: 0.10.0
libtpu: 0.0.40
codegen_flags: <defaults>
</compile_context>

<pallas_src>
import jax
import jax.numpy as jnp
from jax import lax
from jax.experimental import pallas as pl
from jax.experimental.pallas import tpu as pltpu

MARGIN = 5.0


def _vmem_budget_bytes():
    """Per-core VMEM capacity minus headroom (64 MiB on v7x, 128 MiB v5e/v6e)."""
    try:
        cap = int(pltpu.get_tpu_info().vmem_capacity_bytes)
    except Exception:
        cap = 64 * 1024 * 1024            # conservative default = v7x per-core VMEM
    return max(cap - (4 << 20), 16 << 20)


def _pick_row_tile(batch, d, ebytes, vmem_budget):
    """Largest MXU-filling row tile (<=256, multiple of 8, divides batch) whose
    live (tb, B) strip temporaries fit next to the resident (D, B) RHS.
    256 rows fill the MXU on v5e (4x128^2) and v6e/v7x (2x256^2); the VMEM
    bound is what caps it lower on v7x at large B."""
    if batch % 8 != 0:
        return batch                       # odd batch: single monolithic step
    resident = batch * d * ebytes + 8 * batch * 4 + (2 << 20)

    def fits(tb):
        strip = 8 * tb * batch * 4 + 2 * tb * d * ebytes
        return resident + strip <= vmem_budget

    cands = [t for t in (256, 128, 64, 32, 16, 8) if batch % t == 0]
    if batch <= 256:
        cands = [batch] + cands
    for tb in cands:
        if fits(tb):
            return tb
    return cands[-1] if cands else batch


def batch_hard_triplet_loss(rep, labels, *, margin=MARGIN, row_tile=None):
    """rep: (B, D) float, labels: (B,) int -> scalar f32 batch-hard triplet loss."""
    B, D = rep.shape
    ebytes = rep.dtype.itemsize
    vmem_budget = _vmem_budget_bytes()
    tb = int(row_tile) if row_tile is not None else _pick_row_tile(B, D, ebytes, vmem_budget)
    if B % tb != 0:
        raise ValueError(f"row_tile={tb} must divide batch={B}")
    nsteps = B // tb
    if nsteps > 1 and tb % 8 != 0:
        raise ValueError("row_tile must be a multiple of 8 (TPU sublane tiling)")

    # One cheap XLA pass: transposed RHS (paid once, keeps the in-kernel matmul
    # in native MXU orientation) and squared norms (shared, bit-identical,
    # between the row and column views; removes the step-0 in-kernel spike).
    emb_t = rep.T                                         # (D, B) resident RHS
    sq = jnp.sum(rep.astype(jnp.float32) ** 2, axis=1)    # (B,) f32
    sq_row = sq.reshape(B, 1)
    sq_col = sq.reshape(1, B)
    lab_col = labels.reshape(B, 1).astype(jnp.int32)
    lab_row = labels.reshape(1, B).astype(jnp.int32)

    def kernel(row_ref, embt_ref, sqr_ref, sqc_ref, labc_ref, labr_ref, tl_ref):
        g0 = pl.program_id(0) * tb                        # global row offset of this strip

        # (tb, B) strip of the Gram matrix; native (M,K)x(K,N) MXU contraction.
        dot = lax.dot_general(
            row_ref[...], embt_ref[...],
            dimension_numbers=(((1,), (0,)), ((), ())),
            preferred_element_type=jnp.float32)

        dist_sq = jnp.maximum(sqr_ref[...] + sqc_ref[...] - 2.0 * dot, 0.0)

        labels_equal = labc_ref[...] == labr_ref[...]     # (tb, B)
        col_idx = lax.broadcasted_iota(jnp.int32, (tb, B), 1)
        row_idx = lax.broadcasted_iota(jnp.int32, (tb, B), 0) + g0
        pos_mask = jnp.logical_and(labels_equal, row_idx != col_idx)

        # Hardest positive / hardest negative in squared space (sqrt deferred;
        # sqrt is monotone and the reference's "+ max*(1-neg_mask)" shift works
        # identically in squared space, including the all-same-label case).
        hp_sq = jnp.max(jnp.where(pos_mask, dist_sq, 0.0), axis=1, keepdims=True)
        max_sq = jnp.max(dist_sq, axis=1, keepdims=True)
        hn_sq = jnp.min(dist_sq + jnp.where(labels_equal, max_sq, 0.0),
                        axis=1, keepdims=True)

        tl_ref[...] = jnp.maximum(jnp.sqrt(hp_sq) - jnp.sqrt(hn_sq) + margin, 0.0)

    vmem_est = (2 * B * D * ebytes        # resident (D,B) RHS (x2 covers the fallback)
                + 2 * tb * D * ebytes     # streamed row strip, double-buffered
                + 8 * tb * B * 4          # live (tb, B) strip temporaries
                + 10 * B * 4              # norms / labels / per-anchor output
                + (2 << 20))
    vmem_limit = int(min(max(vmem_est, 32 << 20), vmem_budget))

    cost = pl.CostEstimate(
        flops=2 * B * B * D,
        transcendentals=2 * B,
        bytes_accessed=2 * B * D * ebytes + 16 * B,
    )

    def run(single_buffer):
        resident_kw = {}
        if single_buffer:
            # Constant-index blocks: one DMA, one buffer (saves B*D*itemsize VMEM).
            resident_kw = dict(pipeline_mode=pl.Buffered(buffer_count=1))
        in_specs = [
            pl.BlockSpec((tb, D), lambda i: (i, 0)),                 # row strip (streamed)
            pl.BlockSpec((D, B), lambda i: (0, 0), **resident_kw),   # emb^T (resident)
            pl.BlockSpec((tb, 1), lambda i: (i, 0)),                 # row squared norms
            pl.BlockSpec((1, B), lambda i: (0, 0), **resident_kw),   # col squared norms
            pl.BlockSpec((tb, 1), lambda i: (i, 0)),                 # labels (column)
            pl.BlockSpec((1, B), lambda i: (0, 0), **resident_kw),   # labels (row)
        ]
        return pl.pallas_call(
            kernel,
            out_shape=jax.ShapeDtypeStruct((B, 1), jnp.float32),
            grid=(nsteps,),
            in_specs=in_specs,
            out_specs=pl.BlockSpec((tb, 1), lambda i: (i, 0)),
            compiler_params=pltpu.CompilerParams(
                dimension_semantics=("parallel",),   # strips are independent -> both v7x TCs
                vmem_limit_bytes=vmem_limit,
            ),
            cost_estimate=cost,
        )(rep, emb_t, sq_row, sq_col, lab_col, lab_row)

    try:
        tl = run(single_buffer=True)
    except Exception:
        # This jax build rejected pl.Buffered(1); default double-buffered
        # constant blocks are functionally identical (just more VMEM).
        tl = run(single_buffer=False)

    return jnp.mean(tl)


def _reference(rep, labels):
    # pure-JAX mirror of the PyTorch module, for a sanity check
    rep = rep.astype(jnp.float32)
    dot = rep @ rep.T
    sq = jnp.diag(dot)
    dist = sq[None, :] - 2.0 * dot + sq[:, None]
    dist = jnp.maximum(dist, 0.0)
    zmask = (dist == 0.0).astype(jnp.float32)
    dist = (1.0 - zmask) * jnp.sqrt(dist + zmask * 1e-16)
    B = rep.shape[0]
    eye = jnp.eye(B, dtype=bool)
    leq = labels[:, None] == labels[None, :]
    map_ = jnp.logical_and(leq, ~eye).astype(jnp.float32)
    hp = jnp.max(map_ * dist, axis=1, keepdims=True)
    man = (~leq).astype(jnp.float32)
    mx = jnp.max(dist, axis=1, keepdims=True)
    hn = jnp.min(dist + mx * (1.0 - man), axis=1, keepdims=True)
    return jnp.mean(jnp.maximum(hp - hn + MARGIN, 0.0))


if __name__ == "__main__":
    key = jax.random.PRNGKey(0)
    k1, k2, k3 = jax.random.split(key, 3)

    # config 1: single grid step
    B, D = 8, 32
    rep = jax.random.normal(k1, (B, D), dtype=jnp.float32)
    labels = jax.random.randint(k2, (B,), 0, 3, dtype=jnp.int32)
    loss = batch_hard_triplet_loss(rep, labels)
    jax.block_until_ready(loss)
    ref = _reference(rep, labels)
    assert jnp.allclose(loss, ref, atol=1e-3, rtol=1e-3), (loss, ref)

    # config 2: two grid steps (row_tile=8), exercises the parallel strip path
    B2, D2 = 16, 32
    rep2 = jax.random.normal(k3, (B2, D2), dtype=jnp.float32)
    labels2 = jax.random.randint(k2, (B2,), 0, 4, dtype=jnp.int32)
    loss2 = batch_hard_triplet_loss(rep2, labels2, row_tile=8)
    jax.block_until_ready(loss2)
    ref2 = _reference(rep2, labels2)
    assert jnp.allclose(loss2, ref2, atol=1e-3, rtol=1e-3), (loss2, ref2)

    # config 3: degenerate all-same-label batch (checks shift-trick semantics)
    labels3 = jnp.zeros((B,), dtype=jnp.int32)
    loss3 = batch_hard_triplet_loss(rep, labels3)
    jax.block_until_ready(loss3)
    ref3 = _reference(rep, labels3)
    assert jnp.allclose(loss3, ref3, atol=1e-3, rtol=1e-3), (loss3, ref3)

    print("KERNEL_OK")
</pallas_src>

<mosaic_0001>
module attributes {stable_mosaic.version = 11 : i64} {
  func.func @kernel(%arg0: i32, %arg1: memref<8x32xf32, #tpu.memory_space<vmem>>, %arg2: memref<32x8xf32, #tpu.memory_space<vmem>>, %arg3: memref<8x1xf32, #tpu.memory_space<vmem>>, %arg4: memref<1x8xf32, #tpu.memory_space<vmem>>, %arg5: memref<8x1xi32, #tpu.memory_space<vmem>>, %arg6: memref<1x8xi32, #tpu.memory_space<vmem>>, %arg7: memref<8x1xf32, #tpu.memory_space<vmem>>) attributes {dimension_semantics = [#tpu.dimension_semantics<parallel>], iteration_bounds = array<i64: 1>, scalar_prefetch = 0 : i64, scratch_operands = 0 : i64, tpu.core_type = #tpu.core_type<tc>, window_params = [{transform_indices = @transform_0, window_bounds = array<i64: 8, 32>}, {pipeline_mode = #tpu.pipeline_mode<synchronous>, transform_indices = @transform_1, window_bounds = array<i64: 32, 8>}, {transform_indices = @transform_2, window_bounds = array<i64: 8, 1>}, {pipeline_mode = #tpu.pipeline_mode<synchronous>, transform_indices = @transform_3, window_bounds = array<i64: 1, 8>}, {transform_indices = @transform_4, window_bounds = array<i64: 8, 1>}, {pipeline_mode = #tpu.pipeline_mode<synchronous>, transform_indices = @transform_5, window_bounds = array<i64: 1, 8>}, {transform_indices = @transform_6, window_bounds = array<i64: 8, 1>}]} {
    %c8_i32 = arith.constant 8 : i32
    %0 = arith.muli %arg0, %c8_i32 : i32
    %c0 = arith.constant 0 : index
    %c0_0 = arith.constant 0 : index
    %1 = vector.load %arg1[%c0, %c0_0] : memref<8x32xf32, #tpu.memory_space<vmem>>, vector<8x32xf32>
    %c0_1 = arith.constant 0 : index
    %c0_2 = arith.constant 0 : index
    %2 = vector.load %arg2[%c0_1, %c0_2] : memref<32x8xf32, #tpu.memory_space<vmem>>, vector<32x8xf32>
    %cst = arith.constant dense<0.000000e+00> : vector<8x8xf32>
    %3 = tpu.matmul %1, %2, %cst {dimension_numbers = #tpu.dot_dimension_numbers<[1], [0], [0], [1], [0, 0, 1, 1], [], []>} : vector<8x32xf32>, vector<32x8xf32>, vector<8x8xf32> -> vector<8x8xf32>
    %c0_3 = arith.constant 0 : index
    %c0_4 = arith.constant 0 : index
    %4 = vector.load %arg3[%c0_3, %c0_4] : memref<8x1xf32, #tpu.memory_space<vmem>>, vector<8x1xf32>
    %c0_5 = arith.constant 0 : index
    %c0_6 = arith.constant 0 : index
    %5 = vector.load %arg4[%c0_5, %c0_6] : memref<1x8xf32, #tpu.memory_space<vmem>>, vector<1x8xf32>
    %6 = vector.broadcast %4 : vector<8x1xf32> to vector<8x8xf32>
    %7 = vector.broadcast %5 : vector<1x8xf32> to vector<8x8xf32>
    %8 = arith.addf %6, %7 : vector<8x8xf32>
    %cst_7 = arith.constant 2.000000e+00 : f32
    %9 = vector.broadcast %cst_7 : f32 to vector<8x8xf32>
    %10 = arith.mulf %9, %3 : vector<8x8xf32>
    %11 = arith.subf %8, %10 : vector<8x8xf32>
    %cst_8 = arith.constant 0.000000e+00 : f32
    %12 = vector.broadcast %cst_8 : f32 to vector<8x8xf32>
    %13 = arith.maximumf %11, %12 : vector<8x8xf32>
    %c0_9 = arith.constant 0 : index
    %c0_10 = arith.constant 0 : index
    %14 = vector.load %arg5[%c0_9, %c0_10] : memref<8x1xi32, #tpu.memory_space<vmem>>, vector<8x1xi32>
    %c0_11 = arith.constant 0 : index
    %c0_12 = arith.constant 0 : index
    %15 = vector.load %arg6[%c0_11, %c0_12] : memref<1x8xi32, #tpu.memory_space<vmem>>, vector<1x8xi32>
    %16 = vector.broadcast %14 : vector<8x1xi32> to vector<8x8xi32>
    %17 = vector.broadcast %15 : vector<1x8xi32> to vector<8x8xi32>
    %18 = arith.cmpi eq, %16, %17 : vector<8x8xi32>
    %19 = tpu.iota {dimensions = array<i32: 1>} : vector<8x8xi32>
    %20 = tpu.iota {dimensions = array<i32: 0>} : vector<8x8xi32>
    %21 = vector.broadcast %0 : i32 to vector<8x8xi32>
    %22 = arith.addi %20, %21 : vector<8x8xi32>
    %23 = arith.cmpi ne, %22, %19 : vector<8x8xi32>
    %24 = arith.andi %18, %23 : vector<8x8xi1>
    %cst_13 = arith.constant 0.000000e+00 : f32
    %25 = vector.broadcast %cst_13 : f32 to vector<8x8xf32>
    %26 = arith.select %24, %13, %25 : vector<8x8xi1>, vector<8x8xf32>
    %cst_14 = arith.constant dense<0xFF800000> : vector<8xf32>
    %27 = vector.multi_reduction <maximumf>, %26, %cst_14 [1] : vector<8x8xf32> to vector<8xf32>
    %28 = vector.shape_cast %27 : vector<8xf32> to vector<8x1xf32>
    %cst_15 = arith.constant dense<0xFF800000> : vector<8xf32>
    %29 = vector.multi_reduction <maximumf>, %13, %cst_15 [1] : vector<8x8xf32> to vector<8xf32>
    %30 = vector.shape_cast %29 : vector<8xf32> to vector<8x1xf32>
    %cst_16 = arith.constant 0.000000e+00 : f32
    %31 = vector.shape_cast %30 : vector<8x1xf32> to vector<8x1xf32>
    %32 = vector.broadcast %31 : vector<8x1xf32> to vector<8x8xf32>
    %33 = vector.broadcast %cst_16 : f32 to vector<8x8xf32>
    %34 = arith.select %18, %32, %33 : vector<8x8xi1>, vector<8x8xf32>
    %35 = arith.addf %13, %34 : vector<8x8xf32>
    %cst_17 = arith.constant dense<0x7F800000> : vector<8xf32>
    %36 = vector.multi_reduction <minimumf>, %35, %cst_17 [1] : vector<8x8xf32> to vector<8xf32>
    %37 = vector.shape_cast %36 : vector<8xf32> to vector<8x1xf32>
    %38 = math.sqrt %28 : vector<8x1xf32>
    %39 = math.sqrt %37 : vector<8x1xf32>
    %40 = arith.subf %38, %39 : vector<8x1xf32>
    %cst_18 = arith.constant 5.000000e+00 : f32
    %41 = vector.broadcast %cst_18 : f32 to vector<8x1xf32>
    %42 = arith.addf %40, %41 : vector<8x1xf32>
    %cst_19 = arith.constant 0.000000e+00 : f32
    %43 = vector.broadcast %cst_19 : f32 to vector<8x1xf32>
    %44 = arith.maximumf %42, %43 : vector<8x1xf32>
    %c0_20 = arith.constant 0 : index
    %c0_21 = arith.constant 0 : index
    %45 = vector.load %arg7[%c0_20, %c0_21] : memref<8x1xf32, #tpu.memory_space<vmem>>, vector<8x1xf32>
    tpu.vector_store %arg7[%c0_20, %c0_21], %44 {strides = array<i32>} : memref<8x1xf32, #tpu.memory_space<vmem>>, vector<8x1xf32>,
    return
  }
  func.func @transform_0(%arg0: i32) -> (i32, i32) {
    %c0_i32 = arith.constant 0 : i32
    %c0_i32_0 = arith.constant 0 : i32
    return %arg0, %c0_i32 : i32, i32
  }
  func.func @transform_1(%arg0: i32) -> (i32, i32) {
    %c0_i32 = arith.constant 0 : i32
    %c0_i32_0 = arith.constant 0 : i32
    %c0_i32_1 = arith.constant 0 : i32
    return %c0_i32, %c0_i32_0 : i32, i32
  }
  func.func @transform_2(%arg0: i32) -> (i32, i32) {
    %c0_i32 = arith.constant 0 : i32
    %c0_i32_0 = arith.constant 0 : i32
    return %arg0, %c0_i32 : i32, i32
  }
  func.func @transform_3(%arg0: i32) -> (i32, i32) {
    %c0_i32 = arith.constant 0 : i32
    %c0_i32_0 = arith.constant 0 : i32
    %c0_i32_1 = arith.constant 0 : i32
    return %c0_i32, %c0_i32_0 : i32, i32
  }
  func.func @transform_4(%arg0: i32) -> (i32, i32) {
    %c0_i32 = arith.constant 0 : i32
    %c0_i32_0 = arith.constant 0 : i32
    return %arg0, %c0_i32 : i32, i32
  }
  func.func @transform_5(%arg0: i32) -> (i32, i32) {
    %c0_i32 = arith.constant 0 : i32
    %c0_i32_0 = arith.constant 0 : i32
    %c0_i32_1 = arith.constant 0 : i32
    return %c0_i32, %c0_i32_0 : i32, i32
  }
  func.func @transform_6(%arg0: i32) -> (i32, i32) {
    %c0_i32 = arith.constant 0 : i32
    %c0_i32_0 = arith.constant 0 : i32
    return %arg0, %c0_i32 : i32, i32
  }
}

module attributes {stable_mosaic.version = 11 : i64} {
  func.func @kernel(%arg0: i32, %arg1: memref<8x32xf32, #tpu.memory_space<vmem>>, %arg2: memref<32x8xf32, #tpu.memory_space<vmem>>, %arg3: memref<8x1xf32, #tpu.memory_space<vmem>>, %arg4: memref<1x8xf32, #tpu.memory_space<vmem>>, %arg5: memref<8x1xi32, #tpu.memory_space<vmem>>, %arg6: memref<1x8xi32, #tpu.memory_space<vmem>>, %arg7: memref<8x1xf32, #tpu.memory_space<vmem>>) attributes {dimension_semantics = [#tpu.dimension_semantics<parallel>], iteration_bounds = array<i64: 1>, scalar_prefetch = 0 : i64, scratch_operands = 0 : i64, tpu.core_type = #tpu.core_type<tc>, window_params = [{transform_indices = @transform_0, window_bounds = array<i64: 8, 32>}, {pipeline_mode = #tpu.pipeline_mode<synchronous>, transform_indices = @transform_1, window_bounds = array<i64: 32, 8>}, {transform_indices = @transform_2, window_bounds = array<i64: 8, 1>}, {pipeline_mode = #tpu.pipeline_mode<synchronous>, transform_indices = @transform_3, window_bounds = array<i64: 1, 8>}, {transform_indices = @transform_4, window_bounds = array<i64: 8, 1>}, {pipeline_mode = #tpu.pipeline_mode<synchronous>, transform_indices = @transform_5, window_bounds = array<i64: 1, 8>}, {transform_indices = @transform_6, window_bounds = array<i64: 8, 1>}]} {
    %c8_i32 = arith.constant 8 : i32
    %0 = arith.muli %arg0, %c8_i32 : i32
    %c0 = arith.constant 0 : index
    %c0_0 = arith.constant 0 : index
    %1 = vector.load %arg1[%c0, %c0_0] : memref<8x32xf32, #tpu.memory_space<vmem>>, vector<8x32xf32>
    %c0_1 = arith.constant 0 : index
    %c0_2 = arith.constant 0 : index
    %2 = vector.load %arg2[%c0_1, %c0_2] : memref<32x8xf32, #tpu.memory_space<vmem>>, vector<32x8xf32>
    %cst = arith.constant dense<0.000000e+00> : vector<8x8xf32>
    %3 = tpu.matmul %1, %2, %cst {dimension_numbers = #tpu.dot_dimension_numbers<[1], [0], [0], [1], [0, 0, 1, 1], [], []>} : vector<8x32xf32>, vector<32x8xf32>, vector<8x8xf32> -> vector<8x8xf32>
    %c0_3 = arith.constant 0 : index
    %c0_4 = arith.constant 0 : index
    %4 = vector.load %arg3[%c0_3, %c0_4] : memref<8x1xf32, #tpu.memory_space<vmem>>, vector<8x1xf32>
    %c0_5 = arith.constant 0 : index
    %c0_6 = arith.constant 0 : index
    %5 = vector.load %arg4[%c0_5, %c0_6] : memref<1x8xf32, #tpu.memory_space<vmem>>, vector<1x8xf32>
    %6 = vector.broadcast %4 : vector<8x1xf32> to vector<8x8xf32>
    %7 = vector.broadcast %5 : vector<1x8xf32> to vector<8x8xf32>
    %8 = arith.addf %6, %7 : vector<8x8xf32>
    %cst_7 = arith.constant 2.000000e+00 : f32
    %9 = vector.broadcast %cst_7 : f32 to vector<8x8xf32>
    %10 = arith.mulf %9, %3 : vector<8x8xf32>
    %11 = arith.subf %8, %10 : vector<8x8xf32>
    %cst_8 = arith.constant 0.000000e+00 : f32
    %12 = vector.broadcast %cst_8 : f32 to vector<8x8xf32>
    %13 = arith.maximumf %11, %12 : vector<8x8xf32>
    %c0_9 = arith.constant 0 : index
    %c0_10 = arith.constant 0 : index
    %14 = vector.load %arg5[%c0_9, %c0_10] : memref<8x1xi32, #tpu.memory_space<vmem>>, vector<8x1xi32>
    %c0_11 = arith.constant 0 : index
    %c0_12 = arith.constant 0 : index
    %15 = vector.load %arg6[%c0_11, %c0_12] : memref<1x8xi32, #tpu.memory_space<vmem>>, vector<1x8xi32>
    %16 = vector.broadcast %14 : vector<8x1xi32> to vector<8x8xi32>
    %17 = vector.broadcast %15 : vector<1x8xi32> to vector<8x8xi32>
    %18 = arith.cmpi eq, %16, %17 : vector<8x8xi32>
    %19 = tpu.iota {dimensions = array<i32: 1>} : vector<8x8xi32>
    %20 = tpu.iota {dimensions = array<i32: 0>} : vector<8x8xi32>
    %21 = vector.broadcast %0 : i32 to vector<8x8xi32>
    %22 = arith.addi %20, %21 : vector<8x8xi32>
    %23 = arith.cmpi ne, %22, %19 : vector<8x8xi32>
    %24 = arith.andi %18, %23 : vector<8x8xi1>
    %cst_13 = arith.constant 0.000000e+00 : f32
    %25 = vector.broadcast %cst_13 : f32 to vector<8x8xf32>
    %26 = arith.select %24, %13, %25 : vector<8x8xi1>, vector<8x8xf32>
    %cst_14 = arith.constant dense<0xFF800000> : vector<8xf32>
    %27 = vector.multi_reduction <maximumf>, %26, %cst_14 [1] : vector<8x8xf32> to vector<8xf32>
    %28 = vector.shape_cast %27 : vector<8xf32> to vector<8x1xf32>
    %cst_15 = arith.constant dense<0xFF800000> : vector<8xf32>
    %29 = vector.multi_reduction <maximumf>, %13, %cst_15 [1] : vector<8x8xf32> to vector<8xf32>
    %30 = vector.shape_cast %29 : vector<8xf32> to vector<8x1xf32>
    %cst_16 = arith.constant 0.000000e+00 : f32
    %31 = vector.shape_cast %30 : vector<8x1xf32> to vector<8x1xf32>
    %32 = vector.broadcast %31 : vector<8x1xf32> to vector<8x8xf32>
    %33 = vector.broadcast %cst_16 : f32 to vector<8x8xf32>
    %34 = arith.select %18, %32, %33 : vector<8x8xi1>, vector<8x8xf32>
    %35 = arith.addf %13, %34 : vector<8x8xf32>
    %cst_17 = arith.constant dense<0x7F800000> : vector<8xf32>
    %36 = vector.multi_reduction <minimumf>, %35, %cst_17 [1] : vector<8x8xf32> to vector<8xf32>
    %37 = vector.shape_cast %36 : vector<8xf32> to vector<8x1xf32>
    %38 = math.sqrt %28 : vector<8x1xf32>
    %39 = math.sqrt %37 : vector<8x1xf32>
    %40 = arith.subf %38, %39 : vector<8x1xf32>
    %cst_18 = arith.constant 5.000000e+00 : f32
    %41 = vector.broadcast %cst_18 : f32 to vector<8x1xf32>
    %42 = arith.addf %40, %41 : vector<8x1xf32>
    %cst_19 = arith.constant 0.000000e+00 : f32
    %43 = vector.broadcast %cst_19 : f32 to vector<8x1xf32>
    %44 = arith.maximumf %42, %43 : vector<8x1xf32>
    %c0_20 = arith.constant 0 : index
    %c0_21 = arith.constant 0 : index
    %45 = vector.load %arg7[%c0_20, %c0_21] : memref<8x1xf32, #tpu.memory_space<vmem>>, vector<8x1xf32>
    tpu.vector_store %arg7[%c0_20, %c0_21], %44 {strides = array<i32>} : memref<8x1xf32, #tpu.memory_space<vmem>>, vector<8x1xf32>,
    return
  }
  func.func @transform_0(%arg0: i32) -> (i32, i32) {
    %c0_i32 = arith.constant 0 : i32
    %c0_i32_0 = arith.constant 0 : i32
    return %arg0, %c0_i32 : i32, i32
  }
  func.func @transform_1(%arg0: i32) -> (i32, i32) {
    %c0_i32 = arith.constant 0 : i32
    %c0_i32_0 = arith.constant 0 : i32
    %c0_i32_1 = arith.constant 0 : i32
    return %c0_i32, %c0_i32_0 : i32, i32
  }
  func.func @transform_2(%arg0: i32) -> (i32, i32) {
    %c0_i32 = arith.constant 0 : i32
    %c0_i32_0 = arith.constant 0 : i32
    return %arg0, %c0_i32 : i32, i32
  }
  func.func @transform_3(%arg0: i32) -> (i32, i32) {
    %c0_i32 = arith.constant 0 : i32
    %c0_i32_0 = arith.constant 0 : i32
    %c0_i32_1 = arith.constant 0 : i32
    return %c0_i32, %c0_i32_0 : i32, i32
  }
  func.func @transform_4(%arg0: i32) -> (i32, i32) {
    %c0_i32 = arith.constant 0 : i32
    %c0_i32_0 = arith.constant 0 : i32
    return %arg0, %c0_i32 : i32, i32
  }
  func.func @transform_5(%arg0: i32) -> (i32, i32) {
    %c0_i32 = arith.constant 0 : i32
    %c0_i32_0 = arith.constant 0 : i32
    %c0_i32_1 = arith.constant 0 : i32
    return %c0_i32, %c0_i32_0 : i32, i32
  }
  func.func @transform_6(%arg0: i32) -> (i32, i32) {
    %c0_i32 = arith.constant 0 : i32
    %c0_i32_0 = arith.constant 0 : i32
    return %arg0, %c0_i32 : i32, i32
  }
}

</mosaic_0001>

<llo_original>
// kernel: tpu_custom_call.1
$region0: #{tpu_custom_call.1}
  #allocation0 [shape = 'u32[]', space=smem, size = 0x4, offset = 0x4, fixed_abs, tag = 'smem constant byte address 0x4 - core index']
  #allocation1 [shape = 'u32[144,128]{1,0:T(1,128)}', space=vmem, size = 0x12000, scoped, tag = 'internal scratch']
  %s0 = inlined_call_operand.vmem [shape: f32[8,32], index: 0, kind: input, shape index: {}]
  %s1 = inlined_call_operand.vmem [shape: f32[32,8], index: 1, kind: input, shape index: {}]
  %s2 = inlined_call_operand.vmem [shape: f32[8,1], index: 2, kind: input, shape index: {}]
  %s3 = inlined_call_operand.vmem [shape: f32[1,8], index: 3, kind: input, shape index: {}]
  %s4 = inlined_call_operand.vmem [shape: s32[8,1], index: 4, kind: input, shape index: {}]
  %s5 = inlined_call_operand.vmem [shape: s32[1,8], index: 5, kind: input, shape index: {}]
  %s6 = inlined_call_operand.vmem [shape: f32[8,1], index: 6, kind: output, shape index: {}]
  %s7 = sld [smem:[#allocation0]]
  $region34: #{tpu_custom_call.1} parent=0
    _
  %s9 = ssub.s32 1, %s7
  %s10 = scalar_select 0, %s9, %s7
  // Predicated region
  $region2: #{tpu_custom_call.1} parent=0 // pred_check
    _
  $region3: #{tpu_custom_call.1} parent=0 // pred_check_branch
    %12 = sbr.rel (0) target = $region5
  $region4: #{tpu_custom_call.1} parent=0 // pred_region
    _
  $region5: #{tpu_custom_call.1} parent=0 // pred_fallthru
    _
  // Predicated region
  $region6: #{tpu_custom_call.1} parent=0 // pred_check
    _
  $region7: #{tpu_custom_call.1} parent=0 // pred_check_branch
    %14 = sbr.rel (0) target = $region9
  $region8: #{tpu_custom_call.1} parent=0 // pred_region
    _
  $region9: #{tpu_custom_call.1} parent=0 // pred_fallthru
    _
  // Predicated region
  $region10: #{tpu_custom_call.1} parent=0 // pred_check
    _
  $region11: #{tpu_custom_call.1} parent=0 // pred_check_branch
    %16 = sbr.rel (0) target = $region13
  $region12: #{tpu_custom_call.1} parent=0 // pred_region
    _
  $region13: #{tpu_custom_call.1} parent=0 // pred_fallthru
    _
  // Predicated region
  $region14: #{tpu_custom_call.1} parent=0 // pred_check
    _
  $region15: #{tpu_custom_call.1} parent=0 // pred_check_branch
    %18 = sbr.rel (0) target = $region17
  $region16: #{tpu_custom_call.1} parent=0 // pred_region
    _
  $region17: #{tpu_custom_call.1} parent=0 // pred_fallthru
    _
  // Predicated region
  $region18: #{tpu_custom_call.1} parent=0 // pred_check
    _
  $region19: #{tpu_custom_call.1} parent=0 // pred_check_branch
    %20 = sbr.rel (0) target = $region21
  $region20: #{tpu_custom_call.1} parent=0 // pred_region
    _
  $region21: #{tpu_custom_call.1} parent=0 // pred_fallthru
    _
  // Predicated region
  $region22: #{tpu_custom_call.1} parent=0 // pred_check
    _
  $region23: #{tpu_custom_call.1} parent=0 // pred_check_branch
    %22 = sbr.rel (0) target = $region25
  $region24: #{tpu_custom_call.1} parent=0 // pred_region
    _
  $region25: #{tpu_custom_call.1} parent=0 // pred_fallthru
    _
  %s23 = smul.u32 0, 8
  %v24 = vld [vmem:[%s0] sm:$0xff]
  %v25 = vld [vmem:[%s1] sm:$0xff]
  %v26 = vld [vmem:[%s1 + $0x8] sm:$0xff]
  %v27 = vld [vmem:[%s1 + $0x10] sm:$0xff]
  %v28 = vld [vmem:[%s1 + $0x18] sm:$0xff]
  %vm29 = vcmask 261120
  %v31 = vsel %vm29, %v24, 0
  %33 = vmatprep.subr.mxu0 0.0
  %34 = vmatpush1.msra.mxu0 %v25
  %35 = vmatprep.subr.mxu0 0.0
  %36 = vmatpush1.msra.mxu0 %v26
  %37 = vmatprep.subr.mxu0 0.0
  %38 = vmatpush1.msra.mxu0 %v27
  %39 = vmatprep.subr.mxu0 0.0
  %40 = vmatpush1.msra.mxu0 %v28
  %41 = vmatprep.subr.mxu0 0.0
  %42 = vmatpush1.msra.mxu0 0.0
  %43 = vmatprep.subr.mxu0 0.0
  %44 = vmatpush1.msra.mxu0 0.0
  %45 = vmatprep.subr.mxu0 0.0
  %46 = vmatpush1.msra.mxu0 0.0
  %47 = vmatprep.subr.mxu0 0.0
  %48 = vmatpush1.msra.mxu0 0.0
  %49 = vmatprep.subr.mxu0 0.0
  %50 = vmatpush1.msra.mxu0 0.0
  %51 = vmatprep.subr.mxu0 0.0
  %52 = vmatpush1.msra.mxu0 0.0
  %53 = vmatprep.subr.mxu0 0.0
  %54 = vmatpush1.msra.mxu0 0.0
  %55 = vmatprep.subr.mxu0 0.0
  %56 = vmatpush1.msra.mxu0 0.0
  %57 = vmatprep.subr.mxu0 0.0
  %58 = vmatpush1.msra.mxu0 0.0
  %59 = vmatprep.subr.mxu0 0.0
  %60 = vmatpush1.msra.mxu0 0.0
  %61 = vmatprep.subr.mxu0 0.0
  %62 = vmatpush1.msra.mxu0 0.0
  %63 = vmatprep.subr.mxu0 0.0
  %64 = vmatpush1.msra.mxu0 0.0
  %65 = vmatprep.subr.mxu0 0.0
  %66 = vmatpush1.msra.mxu0 0.0
  %67 = vmatprep.subr.mxu0 0.0
  %68 = vmatpush1.msra.mxu0 0.0
  %69 = vmatprep.subr.mxu0 0.0
  %70 = vmatpush1.msra.mxu0 0.0
  %71 = vmatprep.subr.mxu0 0.0
  %72 = vmatpush1.msra.mxu0 0.0
  %73 = vmatprep.subr.mxu0 0.0
  %74 = vmatpush1.msra.mxu0 0.0
  %75 = vmatprep.subr.mxu0 0.0
  %76 = vmatpush1.msra.mxu0 0.0
  %77 = vmatprep.subr.mxu0 0.0
  %78 = vmatpush1.msra.mxu0 0.0
  %79 = vmatprep.subr.mxu0 0.0
  %80 = vmatpush1.msra.mxu0 0.0
  %81 = vmatprep.subr.mxu0 0.0
  %82 = vmatpush1.msra.mxu0 0.0
  %83 = vmatprep.subr.mxu0 0.0
  %84 = vmatpush1.msra.mxu0 0.0
  %85 = vmatprep.subr.mxu0 0.0
  %86 = vmatpush1.msra.mxu0 0.0
  %87 = vmatprep.subr.mxu0 0.0
  %88 = vmatpush1.msra.mxu0 0.0
  %89 = vmatprep.subr.mxu0 0.0
  %90 = vmatpush1.msra.mxu0 0.0
  %91 = vmatprep.subr.mxu0 0.0
  %92 = vmatpush1.msra.mxu0 0.0
  %93 = vmatprep.subr.mxu0 0.0
  %94 = vmatpush1.msra.mxu0 0.0
  %95 = vmatprep.subr.mxu0 0.0
  %96 = vmatpush1.msra.mxu0 0.0
  %97 = vmatprep.mubr.f32.mxu0 0.0
  %98 = vmatmul.mubr.f32.gmra.mrb[0].mxu0 %v31
  %v99 = vpop.f32.mrb[0].mxu0
  %v100 = vadd.f32 0.0, %v99
  %v101 = vpop.f32.mrb[0].mxu0
  %102 = vdwg.mxu0
  %v103 = vld [vmem:[%s2] sm:$0xff]
  %v104 = vld [vmem:[%s3] sm:$0x1]
  %106 = vset.pattern.permute.xlu0 0
  %107 = vperm.xlu0 %106, %v103
  %v108 = vpop.permute.xlu0 %107
  %v111 = vlaneseq
  %v112 = vshrl.u32 %v111, 7
  %v113 = vsub.s32 0, %v112
  %v114 = vrot.slane %v104, %v113
  %v116 = vadd.f32 %v108, %v114
  %v117 = vmul.f32 %v100, 2.0
  %v118 = vsub.f32 %v116, %v117
  %v119 = vmax.f32 %v118, 0.0
  %v120 = vld [vmem:[%s4] sm:$0xff]
  %v121 = vld [vmem:[%s5] sm:$0x1]
  %122 = vset.pattern.permute.xlu0 0
  %123 = vperm.xlu0 %122, %v120
  %v124 = vpop.permute.xlu0 %123
  %v125 = vlaneseq
  %v126 = vshrl.u32 %v125, 7
  %v127 = vsub.s32 0, %v126
  %v128 = vrot.slane %v121, %v127
  %vm129 = vcmp.eq.s32.totalorder %v124, %v128
  %v130 = vlaneseq
  %v131 = vand.u32 %v130, 127
  %v132 = vlaneseq
  %v133 = vshrl.u32 %v132, 7
  %v134 = vstv %s23
  %v135 = vadd.s32 %v133, %v134
  %vm136 = vcmp.ne.s32.totalorder %v135, %v131
  %vm137 = vmand %vm129, %vm136
  %v138 = vsel %vm137, %v119, 0.0
  %vm139 = vcmask 64512
  %v140 = vsel %vm139, %v138, -inf
  %141 = vmax.xlane.f32.xlu0 %v140
  %v142 = vpop.xlane.xlu0 %141
  %v143 = vsel %vm139, %v119, -inf
  %144 = vmax.xlane.f32.xlu0 %v143
  %v145 = vpop.xlane.xlu0 %144
  %v146 = vsel %vm129, %v145, 0.0
  %v147 = vadd.f32 %v119, %v146
  %v148 = vsel %vm139, %v147, inf
  %149 = vmin.xlane.f32.xlu0 %v148
  %v150 = vpop.xlane.xlu0 %149
  %v151 = vrsqrt.pop %v142
  %v152 = vmul.f32 %v142, %v151
  %vm153 = vcmp.eq.f32.partialorder %v142, inf
  %v154 = vsel %vm153, %v142, %v152
  %vm155 = vcmp.eq.f32.partialorder %v142, 0.0
  %v156 = vand.u32 %v142, 2147483648
  %v157 = vsel %vm155, %v156, %v154
  %v158 = vrsqrt.pop %v150
  %v159 = vmul.f32 %v150, %v158
  %vm160 = vcmp.eq.f32.partialorder %v150, inf
  %v161 = vsel %vm160, %v150, %v159
  %vm162 = vcmp.eq.f32.partialorder %v150, 0.0
  %v163 = vand.u32 %v150, 2147483648
  %v164 = vsel %vm162, %v163, %v161
  %v165 = vsub.f32 %v157, %v164
  %v166 = vadd.f32 %v165, 5.0
  %v167 = vmax.f32 %v166, 0.0
  %vm168 = vcmask 7168
  %169 = vst.msk [vmem:[%s6] sm:$0xff] %vm168, %v167
  // Predicated region
  $region26: #{tpu_custom_call.1} parent=0 // pred_check
    _
  $region27: #{tpu_custom_call.1} parent=0 // pred_check_branch
    %171 = sbr.rel (0) target = $region29
  $region28: #{tpu_custom_call.1} parent=0 // pred_region
    _
  $region29: #{tpu_custom_call.1} parent=0 // pred_fallthru
    _
  // Predicated region
  $region30: #{tpu_custom_call.1} parent=0 // pred_check
    _
  $region31: #{tpu_custom_call.1} parent=0 // pred_check_branch
    %173 = sbr.rel (0) target = $region33
  $region32: #{tpu_custom_call.1} parent=0 // pred_region
    _
  $region33: #{tpu_custom_call.1} parent=0 // pred_fallthru
    _

// kernel: tpu_custom_call.1
$region0: #{tpu_custom_call.1}
  #allocation0 [shape = 'u32[]', space=smem, size = 0x4, offset = 0x4, fixed_abs, tag = 'smem constant byte address 0x4 - core index']
  #allocation1 [shape = 'u32[144,128]{1,0:T(1,128)}', space=vmem, size = 0x12000, scoped, tag = 'internal scratch']
  %s0 = inlined_call_operand.vmem [shape: f32[8,32], index: 0, kind: input, shape index: {}]
  %s1 = inlined_call_operand.vmem [shape: f32[32,8], index: 1, kind: input, shape index: {}]
  %s2 = inlined_call_operand.vmem [shape: f32[8,1], index: 2, kind: input, shape index: {}]
  %s3 = inlined_call_operand.vmem [shape: f32[1,8], index: 3, kind: input, shape index: {}]
  %s4 = inlined_call_operand.vmem [shape: s32[8,1], index: 4, kind: input, shape index: {}]
  %s5 = inlined_call_operand.vmem [shape: s32[1,8], index: 5, kind: input, shape index: {}]
  %s6 = inlined_call_operand.vmem [shape: f32[8,1], index: 6, kind: output, shape index: {}]
  %s7 = sld [smem:[#allocation0]]
  $region34: #{tpu_custom_call.1} parent=0
    _
  %s9 = ssub.s32 1, %s7
  %s10 = scalar_select 0, %s9, %s7
  // Predicated region
  $region2: #{tpu_custom_call.1} parent=0 // pred_check
    _
  $region3: #{tpu_custom_call.1} parent=0 // pred_check_branch
    %12 = sbr.rel (0) target = $region5
  $region4: #{tpu_custom_call.1} parent=0 // pred_region
    _
  $region5: #{tpu_custom_call.1} parent=0 // pred_fallthru
    _
  // Predicated region
  $region6: #{tpu_custom_call.1} parent=0 // pred_check
    _
  $region7: #{tpu_custom_call.1} parent=0 // pred_check_branch
    %14 = sbr.rel (0) target = $region9
  $region8: #{tpu_custom_call.1} parent=0 // pred_region
    _
  $region9: #{tpu_custom_call.1} parent=0 // pred_fallthru
    _
  // Predicated region
  $region10: #{tpu_custom_call.1} parent=0 // pred_check
    _
  $region11: #{tpu_custom_call.1} parent=0 // pred_check_branch
    %16 = sbr.rel (0) target = $region13
  $region12: #{tpu_custom_call.1} parent=0 // pred_region
    _
  $region13: #{tpu_custom_call.1} parent=0 // pred_fallthru
    _
  // Predicated region
  $region14: #{tpu_custom_call.1} parent=0 // pred_check
    _
  $region15: #{tpu_custom_call.1} parent=0 // pred_check_branch
    %18 = sbr.rel (0) target = $region17
  $region16: #{tpu_custom_call.1} parent=0 // pred_region
    _
  $region17: #{tpu_custom_call.1} parent=0 // pred_fallthru
    _
  // Predicated region
  $region18: #{tpu_custom_call.1} parent=0 // pred_check
    _
  $region19: #{tpu_custom_call.1} parent=0 // pred_check_branch
    %20 = sbr.rel (0) target = $region21
  $region20: #{tpu_custom_call.1} parent=0 // pred_region
    _
  $region21: #{tpu_custom_call.1} parent=0 // pred_fallthru
    _
  // Predicated region
  $region22: #{tpu_custom_call.1} parent=0 // pred_check
    _
  $region23: #{tpu_custom_call.1} parent=0 // pred_check_branch
    %22 = sbr.rel (0) target = $region25
  $region24: #{tpu_custom_call.1} parent=0 // pred_region
    _
  $region25: #{tpu_custom_call.1} parent=0 // pred_fallthru
    _
  %s23 = smul.u32 0, 8
  %v24 = vld [vmem:[%s0] sm:$0xff]
  %v25 = vld [vmem:[%s1] sm:$0xff]
  %v26 = vld [vmem:[%s1 + $0x8] sm:$0xff]
  %v27 = vld [vmem:[%s1 + $0x10] sm:$0xff]
  %v28 = vld [vmem:[%s1 + $0x18] sm:$0xff]
  %vm29 = vcmask 261120
  %v31 = vsel %vm29, %v24, 0
  %33 = vmatprep.subr.mxu0 0.0
  %34 = vmatpush1.msra.mxu0 %v25
  %35 = vmatprep.subr.mxu0 0.0
  %36 = vmatpush1.msra.mxu0 %v26
  %37 = vmatprep.subr.mxu0 0.0
  %38 = vmatpush1.msra.mxu0 %v27
  %39 = vmatprep.subr.mxu0 0.0
  %40 = vmatpush1.msra.mxu0 %v28
  %41 = vmatprep.subr.mxu0 0.0
  %42 = vmatpush1.msra.mxu0 0.0
  %43 = vmatprep.subr.mxu0 0.0
  %44 = vmatpush1.msra.mxu0 0.0
  %45 = vmatprep.subr.mxu0 0.0
  %46 = vmatpush1.msra.mxu0 0.0
  %47 = vmatprep.subr.mxu0 0.0
  %48 = vmatpush1.msra.mxu0 0.0
  %49 = vmatprep.subr.mxu0 0.0
  %50 = vmatpush1.msra.mxu0 0.0
  %51 = vmatprep.subr.mxu0 0.0
  %52 = vmatpush1.msra.mxu0 0.0
  %53 = vmatprep.subr.mxu0 0.0
  %54 = vmatpush1.msra.mxu0 0.0
  %55 = vmatprep.subr.mxu0 0.0
  %56 = vmatpush1.msra.mxu0 0.0
  %57 = vmatprep.subr.mxu0 0.0
  %58 = vmatpush1.msra.mxu0 0.0
  %59 = vmatprep.subr.mxu0 0.0
  %60 = vmatpush1.msra.mxu0 0.0
  %61 = vmatprep.subr.mxu0 0.0
  %62 = vmatpush1.msra.mxu0 0.0
  %63 = vmatprep.subr.mxu0 0.0
  %64 = vmatpush1.msra.mxu0 0.0
  %65 = vmatprep.subr.mxu0 0.0
  %66 = vmatpush1.msra.mxu0 0.0
  %67 = vmatprep.subr.mxu0 0.0
  %68 = vmatpush1.msra.mxu0 0.0
  %69 = vmatprep.subr.mxu0 0.0
  %70 = vmatpush1.msra.mxu0 0.0
  %71 = vmatprep.subr.mxu0 0.0
  %72 = vmatpush1.msra.mxu0 0.0
  %73 = vmatprep.subr.mxu0 0.0
  %74 = vmatpush1.msra.mxu0 0.0
  %75 = vmatprep.subr.mxu0 0.0
  %76 = vmatpush1.msra.mxu0 0.0
  %77 = vmatprep.subr.mxu0 0.0
  %78 = vmatpush1.msra.mxu0 0.0
  %79 = vmatprep.subr.mxu0 0.0
  %80 = vmatpush1.msra.mxu0 0.0
  %81 = vmatprep.subr.mxu0 0.0
  %82 = vmatpush1.msra.mxu0 0.0
  %83 = vmatprep.subr.mxu0 0.0
  %84 = vmatpush1.msra.mxu0 0.0
  %85 = vmatprep.subr.mxu0 0.0
  %86 = vmatpush1.msra.mxu0 0.0
  %87 = vmatprep.subr.mxu0 0.0
  %88 = vmatpush1.msra.mxu0 0.0
  %89 = vmatprep.subr.mxu0 0.0
  %90 = vmatpush1.msra.mxu0 0.0
  %91 = vmatprep.subr.mxu0 0.0
  %92 = vmatpush1.msra.mxu0 0.0
  %93 = vmatprep.subr.mxu0 0.0
  %94 = vmatpush1.msra.mxu0 0.0
  %95 = vmatprep.subr.mxu0 0.0
  %96 = vmatpush1.msra.mxu0 0.0
  %97 = vmatprep.mubr.f32.mxu0 0.0
  %98 = vmatmul.mubr.f32.gmra.mrb[0].mxu0 %v31
  %v99 = vpop.f32.mrb[0].mxu0
  %v100 = vadd.f32 0.0, %v99
  %v101 = vpop.f32.mrb[0].mxu0
  %102 = vdwg.mxu0
  %v103 = vld [vmem:[%s2] sm:$0xff]
  %v104 = vld [vmem:[%s3] sm:$0x1]
  %106 = vset.pattern.permute.xlu0 0
  %107 = vperm.xlu0 %106, %v103
  %v108 = vpop.permute.xlu0 %107
  %v111 = vlaneseq
  %v112 = vshrl.u32 %v111, 7
  %v113 = vsub.s32 0, %v112
  %v114 = vrot.slane %v104, %v113
  %v116 = vadd.f32 %v108, %v114
  %v117 = vmul.f32 %v100, 2.0
  %v118 = vsub.f32 %v116, %v117
  %v119 = vmax.f32 %v118, 0.0
  %v120 = vld [vmem:[%s4] sm:$0xff]
  %v121 = vld [vmem:[%s5] sm:$0x1]
  %122 = vset.pattern.permute.xlu0 0
  %123 = vperm.xlu0 %122, %v120
  %v124 = vpop.permute.xlu0 %123
  %v125 = vlaneseq
  %v126 = vshrl.u32 %v125, 7
  %v127 = vsub.s32 0, %v126
  %v128 = vrot.slane %v121, %v127
  %vm129 = vcmp.eq.s32.totalorder %v124, %v128
  %v130 = vlaneseq
  %v131 = vand.u32 %v130, 127
  %v132 = vlaneseq
  %v133 = vshrl.u32 %v132, 7
  %v134 = vstv %s23
  %v135 = vadd.s32 %v133, %v134
  %vm136 = vcmp.ne.s32.totalorder %v135, %v131
  %vm137 = vmand %vm129, %vm136
  %v138 = vsel %vm137, %v119, 0.0
  %vm139 = vcmask 64512
  %v140 = vsel %vm139, %v138, -inf
  %141 = vmax.xlane.f32.xlu0 %v140
  %v142 = vpop.xlane.xlu0 %141
  %v143 = vsel %vm139, %v119, -inf
  %144 = vmax.xlane.f32.xlu0 %v143
  %v145 = vpop.xlane.xlu0 %144
  %v146 = vsel %vm129, %v145, 0.0
  %v147 = vadd.f32 %v119, %v146
  %v148 = vsel %vm139, %v147, inf
  %149 = vmin.xlane.f32.xlu0 %v148
  %v150 = vpop.xlane.xlu0 %149
  %v151 = vrsqrt.pop %v142
  %v152 = vmul.f32 %v142, %v151
  %vm153 = vcmp.eq.f32.partialorder %v142, inf
  %v154 = vsel %vm153, %v142, %v152
  %vm155 = vcmp.eq.f32.partialorder %v142, 0.0
  %v156 = vand.u32 %v142, 2147483648
  %v157 = vsel %vm155, %v156, %v154
  %v158 = vrsqrt.pop %v150
  %v159 = vmul.f32 %v150, %v158
  %vm160 = vcmp.eq.f32.partialorder %v150, inf
  %v161 = vsel %vm160, %v150, %v159
  %vm162 = vcmp.eq.f32.partialorder %v150, 0.0
  %v163 = vand.u32 %v150, 2147483648
  %v164 = vsel %vm162, %v163, %v161
  %v165 = vsub.f32 %v157, %v164
  %v166 = vadd.f32 %v165, 5.0
  %v167 = vmax.f32 %v166, 0.0
  %vm168 = vcmask 7168
  %169 = vst.msk [vmem:[%s6] sm:$0xff] %vm168, %v167
  // Predicated region
  $region26: #{tpu_custom_call.1} parent=0 // pred_check
    _
  $region27: #{tpu_custom_call.1} parent=0 // pred_check_branch
    %171 = sbr.rel (0) target = $region29
  $region28: #{tpu_custom_call.1} parent=0 // pred_region
    _
  $region29: #{tpu_custom_call.1} parent=0 // pred_fallthru
    _
  // Predicated region
  $region30: #{tpu_custom_call.1} parent=0 // pred_check
    _
  $region31: #{tpu_custom_call.1} parent=0 // pred_check_branch
    %173 = sbr.rel (0) target = $region33
  $region32: #{tpu_custom_call.1} parent=0 // pred_region
    _
  $region33: #{tpu_custom_call.1} parent=0 // pred_fallthru
    _

</llo_original>
